<compile_context>
chip_gen: v7x
topology: tpu7x:2x2x1
jax: 0.10.0
libtpu: 0.0.40
codegen_flags: <defaults>
</compile_context>

<pallas_src>
import functools

import jax
import jax.numpy as jnp
from jax.experimental import pallas as pl
from jax.experimental.pallas import tpu as pltpu

HEADS = 4
NEG_SLOPE = 0.2
TILE_M = 128   # target-node (row) tile
TILE_K = 128   # source-node (col) tile  # TODO(synk): sweep >=512 for large graphs


def _round_up(x, m):
    return ((x + m - 1) // m) * m


# ------------------ Kernel 1: per-layer feature transform ------------------
# xw = X @ W (bf16 in, f32 acc); alpha_l = xw @ Pl; alpha_r = xw @ Pr
def _gat_transform_kernel(x_ref, w_ref, projl_ref, projr_ref,
                          xw_ref, al_ref, ar_ref):
    xw = jnp.dot(x_ref[...], w_ref[...], preferred_element_type=jnp.float32)
    al_ref[...] = jnp.dot(xw, projl_ref[...], preferred_element_type=jnp.float32)
    ar_ref[...] = jnp.dot(xw, projr_ref[...], preferred_element_type=jnp.float32)
    xw_ref[...] = xw.astype(xw_ref.dtype)


def gat_transform(x, w, proj_l, proj_r, *, tm=TILE_M):
    n, f_in = x.shape
    hc = w.shape[1]
    h = proj_l.shape[1]
    return pl.pallas_call(
        _gat_transform_kernel,
        out_shape=(jax.ShapeDtypeStruct((n, hc), jnp.bfloat16),
                   jax.ShapeDtypeStruct((n, h), jnp.float32),
                   jax.ShapeDtypeStruct((n, h), jnp.float32)),
        grid_spec=pltpu.PrefetchScalarGridSpec(
            num_scalar_prefetch=0,
            grid=(n // tm,),
            in_specs=[pl.BlockSpec((tm, f_in), lambda i: (i, 0)),
                      pl.BlockSpec((f_in, hc), lambda i: (0, 0)),
                      pl.BlockSpec((hc, h), lambda i: (0, 0)),
                      pl.BlockSpec((hc, h), lambda i: (0, 0))],
            out_specs=(pl.BlockSpec((tm, hc), lambda i: (i, 0)),
                       pl.BlockSpec((tm, h), lambda i: (i, 0)),
                       pl.BlockSpec((tm, h), lambda i: (i, 0)))),
        compiler_params=pltpu.CompilerParams(
            dimension_semantics=("parallel",)),
    )(x, w, proj_l, proj_r)


# --------- Kernel 2: multi-head attention + aggregation + bias + relu ------
def _gat_attn_kernel(cnt_ref, ar_ref, alT_ref, xw_ref, b_ref, o_ref,
                     m_scr, l_scr, acc_scr, *, heads, out_ph, neg_slope):
    k = pl.program_id(1)

    @pl.when(k == 0)
    def _():
        m_scr[...] = jnp.full_like(m_scr, -1e30)
        l_scr[...] = jnp.zeros_like(l_scr)
        acc_scr[...] = jnp.zeros_like(acc_scr)

    cnt = cnt_ref[...].astype(jnp.float32)            # [tm, tk] edge counts
    valid = cnt > 0.0
    a_r = ar_ref[...]                                 # [tm, H]  f32
    a_lT = alT_ref[...]                               # [H, tk]  f32
    xw = xw_ref[...]                                  # [tk, H*C] bf16
    m_all = m_scr[...]
    l_all = l_scr[...]
    acc_all = acc_scr[...]

    new_m, new_l, new_acc = [], [], []
    for h in range(heads):
        c0, c1 = h * out_ph, (h + 1) * out_ph
        s = a_r[:, h:h + 1] + a_lT[h:h + 1, :]        # [tm, tk]
        s = jnp.where(s >= 0.0, s, neg_slope * s)     # LeakyReLU(0.2)
        s = jnp.where(valid, s, -1e30)                # mask non-edges
        m_prev = m_all[:, h:h + 1]
        m_new = jnp.maximum(m_prev, jnp.max(s, axis=-1, keepdims=True))
        corr = jnp.exp(m_prev - m_new)
        p = cnt * jnp.exp(s - m_new)                  # count = edge multiplicity
        new_l.append(corr * l_all[:, h:h + 1]
                     + jnp.sum(p, axis=-1, keepdims=True))
        new_m.append(m_new)
        pv = jnp.dot(p.astype(jnp.bfloat16), xw[:, c0:c1],
                     preferred_element_type=jnp.float32)
        new_acc.append(corr * acc_all[:, c0:c1] + pv)

    m_scr[...] = jnp.concatenate(new_m, axis=-1)
    l_scr[...] = jnp.concatenate(new_l, axis=-1)
    acc_scr[...] = jnp.concatenate(new_acc, axis=-1)

    @pl.when(k == pl.num_programs(1) - 1)
    def _():
        l_fin = l_scr[...]
        acc_fin = acc_scr[...]
        outs = []
        for h in range(heads):
            c0, c1 = h * out_ph, (h + 1) * out_ph
            inv = pl.reciprocal(l_fin[:, h:h + 1], approx=True)
            outs.append(acc_fin[:, c0:c1] * inv)
        o = jnp.concatenate(outs, axis=-1) + b_ref[...]
        o_ref[...] = jnp.maximum(o, 0.0).astype(o_ref.dtype)  # fused F.relu


def gat_attention(cnt, alpha_r, alpha_l_t, xw, bias2d, *, heads,
                  neg_slope=NEG_SLOPE, tm=TILE_M, tk=TILE_K):
    n = cnt.shape[0]
    hc = xw.shape[1]
    h = heads
    out_ph = hc // heads
    kernel = functools.partial(_gat_attn_kernel, heads=heads, out_ph=out_ph,
                               neg_slope=neg_slope)
    return pl.pallas_call(
        kernel,
        out_shape=jax.ShapeDtypeStruct((n, hc), jnp.bfloat16),
        grid_spec=pltpu.PrefetchScalarGridSpec(
            num_scalar_prefetch=0,
            grid=(n // tm, n // tk),
            in_specs=[pl.BlockSpec((tm, tk), lambda i, k: (i, k)),   # counts
                      pl.BlockSpec((tm, h), lambda i, k: (i, 0)),    # alpha_r
                      pl.BlockSpec((h, tk), lambda i, k: (0, k)),    # alpha_l^T
                      pl.BlockSpec((tk, hc), lambda i, k: (k, 0)),   # X @ W
                      pl.BlockSpec((1, hc), lambda i, k: (0, 0))],   # bias
            out_specs=pl.BlockSpec((tm, hc), lambda i, k: (i, 0)),
            scratch_shapes=[pltpu.VMEM((tm, h), jnp.float32),    # running max
                            pltpu.VMEM((tm, h), jnp.float32),    # running denom
                            pltpu.VMEM((tm, hc), jnp.float32)]), # accumulator
        compiler_params=pltpu.CompilerParams(
            dimension_semantics=("parallel", "arbitrary")),
    )(cnt, alpha_r, alpha_l_t, xw, bias2d)


# ------------- Kernel 3: fused global_mean_pool + MLP head -----------------
def _pool_head_kernel(p_ref, x_ref, w1_ref, b1_ref, w2_ref, b2_ref, o_ref):
    pooled = jnp.dot(p_ref[...], x_ref[...].astype(jnp.float32),
                     preferred_element_type=jnp.float32)
    h = jnp.maximum(
        jnp.dot(pooled, w1_ref[...], preferred_element_type=jnp.float32)
        + b1_ref[...], 0.0)
    # F.dropout(p=0.5, training=False) -> identity in eval mode
    logits = jnp.dot(h, w2_ref[...], preferred_element_type=jnp.float32) + b2_ref[...]
    m = jnp.max(logits, axis=-1, keepdims=True)
    z = logits - m
    lse = jnp.log(jnp.sum(jnp.exp(z), axis=-1, keepdims=True))
    o_ref[...] = z - lse


def _full_spec(shape):
    nd = len(shape)
    return pl.BlockSpec(shape, lambda: (0,) * nd)


def pool_head(pool_mat, x, w1, b1, w2, b2):
    g = pool_mat.shape[0]
    c = w2.shape[1]
    b1_2d = b1.reshape(1, -1)
    b2_2d = b2.reshape(1, -1)
    return pl.pallas_call(
        _pool_head_kernel,
        out_shape=jax.ShapeDtypeStruct((g, c), jnp.float32),
        in_specs=[_full_spec(pool_mat.shape), _full_spec(x.shape),
                  _full_spec(w1.shape), _full_spec(b1_2d.shape),
                  _full_spec(w2.shape), _full_spec(b2_2d.shape)],
        out_specs=_full_spec((g, c)),
    )(pool_mat, x, w1, b1_2d, w2, b2_2d)


# ------------------------------- Glue (JAX) --------------------------------
def att_to_proj(att):
    """att [H, C] -> block-diagonal projection [H*C, H] so that
    (XW @ proj)[n, h] == sum_c XW[n, h*C + c] * att[h, c]."""
    h, c = att.shape
    rows = jnp.arange(h * c)
    cols = jnp.repeat(jnp.arange(h), c)
    return jnp.zeros((h * c, h), jnp.float32).at[rows, cols].set(att.reshape(-1))


def build_count_matrix(edge_index, edge_weight, num_nodes, n_pad):
    """Dense padded edge-count matrix cnt[i, j] = #edges (j -> i), with data
    self-loops removed, zero-weight edges masked out, and unit self-loops added
    for every (incl. padded) node — matches GATConv's remove/add_self_loops and
    the alpha[edge_weight == 0] = -inf mask.  Counts preserve edge multiplicity
    so the softmax denominator matches the sparse formulation exactly."""
    src = edge_index[0]
    dst = edge_index[1]
    if edge_weight is None:
        edge_weight = jnp.ones(src.shape[0], jnp.float32)
    keep = ((src != dst) & (edge_weight != 0)).astype(jnp.float32)
    cnt = jnp.zeros((n_pad, n_pad), jnp.float32).at[dst, src].add(keep)
    cnt = cnt + jnp.eye(n_pad, dtype=jnp.float32)
    return cnt.astype(jnp.bfloat16)


def build_pool_matrix(batch, num_graphs, n_pad, g_pad):
    """[Gp, Np] matrix with 1/count_g where batch[n] == g (global_mean_pool)."""
    one_hot = jax.nn.one_hot(batch, g_pad, dtype=jnp.float32)   # [N, Gp]
    counts = jnp.sum(one_hot, axis=0)
    counts = jnp.where(counts > 0, counts, 1.0)
    pool = jnp.zeros((g_pad, n_pad), jnp.float32)
    return pool.at[:, :batch.shape[0]].set(one_hot.T / counts[:, None])


def init_params(key, num_features, hidden, num_classes, num_layers, heads=HEADS):
    c = hidden // heads

    def glorot(k, shape, fan_in, fan_out):
        lim = jnp.sqrt(6.0 / (fan_in + fan_out))
        return jax.random.uniform(k, shape, jnp.float32, -lim, lim)

    keys = jax.random.split(key, 3 * num_layers + 2)
    ki = 0
    convs = []
    f_in = num_features
    for _ in range(num_layers):
        w = glorot(keys[ki], (f_in, hidden), f_in, hidden); ki += 1
        att_l = glorot(keys[ki], (heads, c), c, 1); ki += 1
        att_r = glorot(keys[ki], (heads, c), c, 1); ki += 1
        convs.append({"w": w,
                      "proj_l": att_to_proj(att_l),
                      "proj_r": att_to_proj(att_r),
                      "bias": jnp.zeros((hidden,), jnp.float32)})
        f_in = hidden
    lin1_w = glorot(keys[ki], (hidden, hidden), hidden, hidden); ki += 1
    lin2_w = glorot(keys[ki], (hidden, num_classes), hidden, num_classes); ki += 1
    return {"convs": convs,
            "lin1_w": lin1_w, "lin1_b": jnp.zeros((hidden,), jnp.float32),
            "lin2_w": lin2_w, "lin2_b": jnp.zeros((num_classes,), jnp.float32)}


def gat_forward(params, x, edge_index, batch, num_graphs, edge_weight=None,
                *, heads=HEADS):
    n = x.shape[0]
    hidden = params["lin1_w"].shape[0]
    n_pad = _round_up(max(n, TILE_M, TILE_K), max(TILE_M, TILE_K))

    x_p = jnp.zeros((n_pad, x.shape[1]), jnp.bfloat16).at[:n].set(
        x.astype(jnp.bfloat16))
    cnt = build_count_matrix(edge_index, edge_weight, n, n_pad)

    h_nodes = x_p
    for layer in params["convs"]:
        xw, a_l, a_r = gat_transform(h_nodes, layer["w"].astype(jnp.bfloat16),
                                     layer["proj_l"], layer["proj_r"])
        a_l_t = a_l.T                               # [H, Np], tiny transpose
        h_nodes = gat_attention(cnt, a_r, a_l_t, xw,
                                layer["bias"].reshape(1, -1), heads=heads)
    last = h_nodes[:n].astype(jnp.float32)          # [N, hidden]

    g_pad = _round_up(num_graphs, 8)
    pool = build_pool_matrix(batch, num_graphs, n_pad, g_pad)
    log_probs = pool_head(pool, h_nodes, params["lin1_w"], params["lin1_b"],
                          params["lin2_w"], params["lin2_b"])
    return log_probs[:num_graphs], last


# --------------------------------- Main -------------------------------------
if __name__ == "__main__":
    key = jax.random.PRNGKey(0)
    k_x, k_e, k_p = jax.random.split(key, 3)

    # small synthetic "dataset": 16 nodes, 16 features, 4 classes, 2 graphs
    num_nodes = 16
    num_features = 16
    num_classes = 4
    hidden = 32
    num_layers = 3
    num_graphs = 2

    x = jax.random.normal(k_x, (num_nodes, num_features), jnp.float32)

    # deterministic random undirected edges (symmetrized)
    n_rand_edges = 20
    src = jax.random.randint(k_e, (n_rand_edges,), 0, num_nodes)
    dst = jax.random.randint(jax.random.fold_in(k_e, 1), (n_rand_edges,), 0,
                             num_nodes)
    edge_index = jnp.stack([jnp.concatenate([src, dst]),
                            jnp.concatenate([dst, src])], axis=0).astype(jnp.int32)

    # first 8 nodes -> graph 0, last 8 -> graph 1
    batch = jnp.concatenate([jnp.zeros(8, jnp.int32), jnp.ones(8, jnp.int32)])

    params = init_params(k_p, num_features, hidden, num_classes, num_layers)

    log_probs, last = gat_forward(params, x, edge_index, batch, num_graphs)
    jax.block_until_ready(log_probs)
    jax.block_until_ready(last)

    assert log_probs.shape == (num_graphs, num_classes)
    assert last.shape == (num_nodes, hidden)
    assert bool(jnp.all(jnp.isfinite(log_probs)))
    assert bool(jnp.all(jnp.isfinite(last)))
    # log_softmax rows should exponentiate-sum to ~1
    assert jnp.allclose(jnp.sum(jnp.exp(log_probs), axis=-1), 1.0, atol=1e-3)

    print("KERNEL_OK")
</pallas_src>

<mosaic_0001>
module attributes {stable_mosaic.version = 11 : i64} {
  func.func @_gat_transform_kernel(%arg0: i32, %arg1: memref<128x16xbf16, #tpu.memory_space<vmem>>, %arg2: memref<16x32xbf16, #tpu.memory_space<vmem>>, %arg3: memref<32x4xf32, #tpu.memory_space<vmem>>, %arg4: memref<32x4xf32, #tpu.memory_space<vmem>>, %arg5: memref<128x32xbf16, #tpu.memory_space<vmem>>, %arg6: memref<128x4xf32, #tpu.memory_space<vmem>>, %arg7: memref<128x4xf32, #tpu.memory_space<vmem>>) attributes {dimension_semantics = [#tpu.dimension_semantics<parallel>], iteration_bounds = array<i64: 1>, scalar_prefetch = 0 : i64, scratch_operands = 0 : i64, tpu.core_type = #tpu.core_type<tc>, window_params = [{transform_indices = @transform_0, window_bounds = array<i64: 128, 16>}, {pipeline_mode = #tpu.pipeline_mode<synchronous>, transform_indices = @transform_1, window_bounds = array<i64: 16, 32>}, {pipeline_mode = #tpu.pipeline_mode<synchronous>, transform_indices = @transform_2, window_bounds = array<i64: 32, 4>}, {pipeline_mode = #tpu.pipeline_mode<synchronous>, transform_indices = @transform_3, window_bounds = array<i64: 32, 4>}, {transform_indices = @transform_4, window_bounds = array<i64: 128, 32>}, {transform_indices = @transform_5, window_bounds = array<i64: 128, 4>}, {transform_indices = @transform_6, window_bounds = array<i64: 128, 4>}]} {
    %c0 = arith.constant 0 : index
    %c0_0 = arith.constant 0 : index
    %0 = vector.load %arg1[%c0, %c0_0] : memref<128x16xbf16, #tpu.memory_space<vmem>>, vector<128x16xbf16>
    %c0_1 = arith.constant 0 : index
    %c0_2 = arith.constant 0 : index
    %1 = vector.load %arg2[%c0_1, %c0_2] : memref<16x32xbf16, #tpu.memory_space<vmem>>, vector<16x32xbf16>
    %cst = arith.constant dense<0.000000e+00> : vector<128x32xf32>
    %2 = tpu.matmul %0, %1, %cst {dimension_numbers = #tpu.dot_dimension_numbers<[1], [0], [0], [1], [0, 0, 1, 1], [], []>} : vector<128x16xbf16>, vector<16x32xbf16>, vector<128x32xf32> -> vector<128x32xf32>
    %c0_3 = arith.constant 0 : index
    %c0_4 = arith.constant 0 : index
    %3 = vector.load %arg3[%c0_3, %c0_4] : memref<32x4xf32, #tpu.memory_space<vmem>>, vector<32x4xf32>
    %cst_5 = arith.constant dense<0.000000e+00> : vector<128x4xf32>
    %4 = tpu.matmul %2, %3, %cst_5 {dimension_numbers = #tpu.dot_dimension_numbers<[1], [0], [0], [1], [0, 0, 1, 1], [], []>} : vector<128x32xf32>, vector<32x4xf32>, vector<128x4xf32> -> vector<128x4xf32>
    %c0_6 = arith.constant 0 : index
    %c0_7 = arith.constant 0 : index
    %5 = vector.load %arg6[%c0_6, %c0_7] : memref<128x4xf32, #tpu.memory_space<vmem>>, vector<128x4xf32>
    tpu.vector_store %arg6[%c0_6, %c0_7], %4 {strides = array<i32>} : memref<128x4xf32, #tpu.memory_space<vmem>>, vector<128x4xf32>,
    %c0_8 = arith.constant 0 : index
    %c0_9 = arith.constant 0 : index
    %6 = vector.load %arg4[%c0_8, %c0_9] : memref<32x4xf32, #tpu.memory_space<vmem>>, vector<32x4xf32>
    %cst_10 = arith.constant dense<0.000000e+00> : vector<128x4xf32>
    %7 = tpu.matmul %2, %6, %cst_10 {dimension_numbers = #tpu.dot_dimension_numbers<[1], [0], [0], [1], [0, 0, 1, 1], [], []>} : vector<128x32xf32>, vector<32x4xf32>, vector<128x4xf32> -> vector<128x4xf32>
    %c0_11 = arith.constant 0 : index
    %c0_12 = arith.constant 0 : index
    %8 = vector.load %arg7[%c0_11, %c0_12] : memref<128x4xf32, #tpu.memory_space<vmem>>, vector<128x4xf32>
    tpu.vector_store %arg7[%c0_11, %c0_12], %7 {strides = array<i32>} : memref<128x4xf32, #tpu.memory_space<vmem>>, vector<128x4xf32>,
    %9 = arith.truncf %2 : vector<128x32xf32> to vector<128x32xbf16>
    %c0_13 = arith.constant 0 : index
    %c0_14 = arith.constant 0 : index
    %10 = vector.load %arg5[%c0_13, %c0_14] : memref<128x32xbf16, #tpu.memory_space<vmem>>, vector<128x32xbf16>
    tpu.vector_store %arg5[%c0_13, %c0_14], %9 {strides = array<i32>} : memref<128x32xbf16, #tpu.memory_space<vmem>>, vector<128x32xbf16>,
    return
  }
  func.func @transform_0(%arg0: i32) -> (i32, i32) {
    %c0_i32 = arith.constant 0 : i32
    %c0_i32_0 = arith.constant 0 : i32
    return %arg0, %c0_i32 : i32, i32
  }
  func.func @transform_1(%arg0: i32) -> (i32, i32) {
    %c0_i32 = arith.constant 0 : i32
    %c0_i32_0 = arith.constant 0 : i32
    %c0_i32_1 = arith.constant 0 : i32
    return %c0_i32, %c0_i32_0 : i32, i32
  }
  func.func @transform_2(%arg0: i32) -> (i32, i32) {
    %c0_i32 = arith.constant 0 : i32
    %c0_i32_0 = arith.constant 0 : i32
    %c0_i32_1 = arith.constant 0 : i32
    return %c0_i32, %c0_i32_0 : i32, i32
  }
  func.func @transform_3(%arg0: i32) -> (i32, i32) {
    %c0_i32 = arith.constant 0 : i32
    %c0_i32_0 = arith.constant 0 : i32
    %c0_i32_1 = arith.constant 0 : i32
    return %c0_i32, %c0_i32_0 : i32, i32
  }
  func.func @transform_4(%arg0: i32) -> (i32, i32) {
    %c0_i32 = arith.constant 0 : i32
    %c0_i32_0 = arith.constant 0 : i32
    return %arg0, %c0_i32 : i32, i32
  }
  func.func @transform_5(%arg0: i32) -> (i32, i32) {
    %c0_i32 = arith.constant 0 : i32
    %c0_i32_0 = arith.constant 0 : i32
    return %arg0, %c0_i32 : i32, i32
  }
  func.func @transform_6(%arg0: i32) -> (i32, i32) {
    %c0_i32 = arith.constant 0 : i32
    %c0_i32_0 = arith.constant 0 : i32
    return %arg0, %c0_i32 : i32, i32
  }
}

</mosaic_0001>

<llo_original>
// kernel: tpu_custom_call.1
$region0: #{tpu_custom_call.1}
  #allocation0 [shape = 'u32[]', space=smem, size = 0x4, offset = 0x4, fixed_abs, tag = 'smem constant byte address 0x4 - core index']
  #allocation1 [shape = 'u32[144,128]{1,0:T(1,128)}', space=vmem, size = 0x12000, scoped, tag = 'internal scratch']
  %s0 = inlined_call_operand.vmem [shape: bf16[128,16], index: 0, kind: input, shape index: {}]
  %s1 = inlined_call_operand.vmem [shape: bf16[16,32], index: 1, kind: input, shape index: {}]
  %s2 = inlined_call_operand.vmem [shape: f32[32,4], index: 2, kind: input, shape index: {}]
  %s3 = inlined_call_operand.vmem [shape: f32[32,4], index: 3, kind: input, shape index: {}]
  %s4 = inlined_call_operand.vmem [shape: bf16[128,32], index: 4, kind: output, shape index: {0}]
  %s5 = inlined_call_operand.vmem [shape: f32[128,4], index: 5, kind: output, shape index: {1}]
  %s6 = inlined_call_operand.vmem [shape: f32[128,4], index: 6, kind: output, shape index: {2}]
  %7 = xla_tuple %s4, %s5, %s6
  %s8 = sld [smem:[#allocation0]]
  $region42: #{tpu_custom_call.1} parent=0
    _
  %s10 = ssub.s32 1, %s8
  %s11 = scalar_select 0, %s10, %s8
  // Predicated region
  $region2: #{tpu_custom_call.1} parent=0 // pred_check
    _
  $region3: #{tpu_custom_call.1} parent=0 // pred_check_branch
    %13 = sbr.rel (0) target = $region5
  $region4: #{tpu_custom_call.1} parent=0 // pred_region
    _
  $region5: #{tpu_custom_call.1} parent=0 // pred_fallthru
    _
  // Predicated region
  $region6: #{tpu_custom_call.1} parent=0 // pred_check
    _
  $region7: #{tpu_custom_call.1} parent=0 // pred_check_branch
    %15 = sbr.rel (0) target = $region9
  $region8: #{tpu_custom_call.1} parent=0 // pred_region
    _
  $region9: #{tpu_custom_call.1} parent=0 // pred_fallthru
    _
  // Predicated region
  $region10: #{tpu_custom_call.1} parent=0 // pred_check
    _
  $region11: #{tpu_custom_call.1} parent=0 // pred_check_branch
    %17 = sbr.rel (0) target = $region13
  $region12: #{tpu_custom_call.1} parent=0 // pred_region
    _
  $region13: #{tpu_custom_call.1} parent=0 // pred_fallthru
    _
  // Predicated region
  $region14: #{tpu_custom_call.1} parent=0 // pred_check
    _
  $region15: #{tpu_custom_call.1} parent=0 // pred_check_branch
    %19 = sbr.rel (0) target = $region17
  $region16: #{tpu_custom_call.1} parent=0 // pred_region
    _
  $region17: #{tpu_custom_call.1} parent=0 // pred_fallthru
    _
  %v21 = vld [vmem:[%s0] sm:$0xf]
  %v22 = vld [vmem:[%s0 + $0x4] sm:$0xf]
  %v23 = vld [vmem:[%s0 + $0x8] sm:$0xf]
  %v24 = vld [vmem:[%s0 + $0xc] sm:$0xf]
  %v25 = vld [vmem:[%s0 + $0x10] sm:$0xf]
  %v26 = vld [vmem:[%s0 + $0x14] sm:$0xf]
  %v27 = vld [vmem:[%s0 + $0x18] sm:$0xf]
  %v28 = vld [vmem:[%s0 + $0x1c] sm:$0xf]
  %v29 = vld [vmem:[%s0 + $0x20] sm:$0xf]
  %v30 = vld [vmem:[%s0 + $0x24] sm:$0xf]
  %v31 = vld [vmem:[%s0 + $0x28] sm:$0xf]
  %v32 = vld [vmem:[%s0 + $0x2c] sm:$0xf]
  %v33 = vld [vmem:[%s0 + $0x30] sm:$0xf]
  %v34 = vld [vmem:[%s0 + $0x34] sm:$0xf]
  %v35 = vld [vmem:[%s0 + $0x38] sm:$0xf]
  %v36 = vld [vmem:[%s0 + $0x3c] sm:$0xf]
  %v37 = vld [vmem:[%s1] sm:$0xf]
  %v38 = vld [vmem:[%s1 + $0x4] sm:$0xf]
  %v55 = vunpack.c.l.b16 %v21
  %v56 = vunpack.c.l.b16 %v22
  %v57 = vunpack.c.l.b16 %v23
  %v58 = vunpack.c.l.b16 %v24
  %v59 = vunpack.c.l.b16 %v25
  %v60 = vunpack.c.l.b16 %v26
  %v61 = vunpack.c.l.b16 %v27
  %v62 = vunpack.c.l.b16 %v28
  %v63 = vunpack.c.l.b16 %v29
  %v64 = vunpack.c.l.b16 %v30
  %v65 = vunpack.c.l.b16 %v31
  %v66 = vunpack.c.l.b16 %v32
  %v67 = vunpack.c.l.b16 %v33
  %v68 = vunpack.c.l.b16 %v34
  %v69 = vunpack.c.l.b16 %v35
  %v70 = vunpack.c.l.b16 %v36
  %v71 = vpack.c.b16 %v56, %v55
  %v72 = vpack.c.b16 %v58, %v57
  %v73 = vpack.c.b16 %v60, %v59
  %v74 = vpack.c.b16 %v62, %v61
  %v75 = vpack.c.b16 %v64, %v63
  %v76 = vpack.c.b16 %v66, %v65
  %v77 = vpack.c.b16 %v68, %v67
  %v78 = vpack.c.b16 %v70, %v69
  %v81 = vunpack.c.l.b16 %v37
  %v82 = vunpack.c.l.b16 %v38
  %v83 = vpack.c.b16 %v82, %v81
  %vm85 = vcmask 130048
  %v87 = vsel %vm85, %v71, 0
  %v90 = vsel %vm85, %v72, 0
  %v93 = vsel %vm85, %v73, 0
  %v96 = vsel %vm85, %v74, 0
  %v99 = vsel %vm85, %v75, 0
  %v102 = vsel %vm85, %v76, 0
  %v105 = vsel %vm85, %v77, 0
  %v108 = vsel %vm85, %v78, 0
  %110 = vmatprep.subr.bf16.mxu0 0
  %111 = vmatpush1.bf16.msra.mxu0 %v83
  %112 = vmatprep.subr.bf16.mxu0 0
  %113 = vmatpush1.bf16.msra.mxu0 0
  %114 = vmatprep.subr.bf16.mxu0 0
  %115 = vmatpush1.bf16.msra.mxu0 0
  %116 = vmatprep.subr.bf16.mxu0 0
  %117 = vmatpush1.bf16.msra.mxu0 0
  %118 = vmatprep.subr.bf16.mxu0 0
  %119 = vmatpush1.bf16.msra.mxu0 0
  %120 = vmatprep.subr.bf16.mxu0 0
  %121 = vmatpush1.bf16.msra.mxu0 0
  %122 = vmatprep.subr.bf16.mxu0 0
  %123 = vmatpush1.bf16.msra.mxu0 0
  %124 = vmatprep.subr.bf16.mxu0 0
  %125 = vmatpush1.bf16.msra.mxu0 0
  %126 = vmatprep.subr.bf16.mxu0 0
  %127 = vmatpush1.bf16.msra.mxu0 0
  %128 = vmatprep.subr.bf16.mxu0 0
  %129 = vmatpush1.bf16.msra.mxu0 0
  %130 = vmatprep.subr.bf16.mxu0 0
  %131 = vmatpush1.bf16.msra.mxu0 0
  %132 = vmatprep.subr.bf16.mxu0 0
  %133 = vmatpush1.bf16.msra.mxu0 0
  %134 = vmatprep.subr.bf16.mxu0 0
  %135 = vmatpush1.bf16.msra.mxu0 0
  %136 = vmatprep.subr.bf16.mxu0 0
  %137 = vmatpush1.bf16.msra.mxu0 0
  %138 = vmatprep.subr.bf16.mxu0 0
  %139 = vmatpush1.bf16.msra.mxu0 0
  %140 = vmatprep.subr.bf16.mxu0 0
  %141 = vmatpush1.bf16.msra.mxu0 0
  %142 = vmatprep.mubr.bf16.mxu0 0
  %143 = vmatmul.mubr.bf16.gmra.mrb[0].mxu0 %v87
  %v144 = vpop.f32.mrb[0].mxu0
  %v145 = vadd.f32 0.0, %v144
  %v146 = vpop.f32.mrb[0].mxu0
  %v147 = vpop.f32.mrb[0].mxu0
  %v148 = vadd.f32 0.0, %v147
  %v149 = vpop.f32.mrb[0].mxu0
  %150 = vmatprep.mubr.bf16.mxu0 0
  %151 = vmatmul.mubr.bf16.gmra.mrb[0].mxu0 %v90
  %v152 = vpop.f32.mrb[0].mxu0
  %v153 = vadd.f32 0.0, %v152
  %v154 = vpop.f32.mrb[0].mxu0
  %v155 = vpop.f32.mrb[0].mxu0
  %v156 = vadd.f32 0.0, %v155
  %v157 = vpop.f32.mrb[0].mxu0
  %158 = vmatprep.mubr.bf16.mxu0 0
  %159 = vmatmul.mubr.bf16.gmra.mrb[0].mxu0 %v93
  %v160 = vpop.f32.mrb[0].mxu0
  %v161 = vadd.f32 0.0, %v160
  %v162 = vpop.f32.mrb[0].mxu0
  %v163 = vpop.f32.mrb[0].mxu0
  %v164 = vadd.f32 0.0, %v163
  %v165 = vpop.f32.mrb[0].mxu0
  %166 = vmatprep.mubr.bf16.mxu0 0
  %167 = vmatmul.mubr.bf16.gmra.mrb[0].mxu0 %v96
  %v168 = vpop.f32.mrb[0].mxu0
  %v169 = vadd.f32 0.0, %v168
  %v170 = vpop.f32.mrb[0].mxu0
  %v171 = vpop.f32.mrb[0].mxu0
  %v172 = vadd.f32 0.0, %v171
  %v173 = vpop.f32.mrb[0].mxu0
  %174 = vmatprep.mubr.bf16.mxu0 0
  %175 = vmatmul.mubr.bf16.gmra.mrb[0].mxu0 %v99
  %v176 = vpop.f32.mrb[0].mxu0
  %v177 = vadd.f32 0.0, %v176
  %v178 = vpop.f32.mrb[0].mxu0
  %v179 = vpop.f32.mrb[0].mxu0
  %v180 = vadd.f32 0.0, %v179
  %v181 = vpop.f32.mrb[0].mxu0
  %182 = vmatprep.mubr.bf16.mxu0 0
  %183 = vmatmul.mubr.bf16.gmra.mrb[0].mxu0 %v102
  %v184 = vpop.f32.mrb[0].mxu0
  %v185 = vadd.f32 0.0, %v184
  %v186 = vpop.f32.mrb[0].mxu0
  %v187 = vpop.f32.mrb[0].mxu0
  %v188 = vadd.f32 0.0, %v187
  %v189 = vpop.f32.mrb[0].mxu0
  %190 = vmatprep.mubr.bf16.mxu0 0
  %191 = vmatmul.mubr.bf16.gmra.mrb[0].mxu0 %v105
  %v192 = vpop.f32.mrb[0].mxu0
  %v193 = vadd.f32 0.0, %v192
  %v194 = vpop.f32.mrb[0].mxu0
  %v195 = vpop.f32.mrb[0].mxu0
  %v196 = vadd.f32 0.0, %v195
  %v197 = vpop.f32.mrb[0].mxu0
  %198 = vmatprep.mubr.bf16.mxu0 0
  %199 = vmatmul.mubr.bf16.gmra.mrb[0].mxu0 %v108
  %v200 = vpop.f32.mrb[0].mxu0
  %v201 = vadd.f32 0.0, %v200
  %v202 = vpop.f32.mrb[0].mxu0
  %v203 = vpop.f32.mrb[0].mxu0
  %v204 = vadd.f32 0.0, %v203
  %v205 = vpop.f32.mrb[0].mxu0
  %206 = vdwg.mxu0
  %v207 = vld [vmem:[%s2] sm:$0xff]
  %v208 = vld [vmem:[%s2 + $0x8] sm:$0xff]
  %v209 = vld [vmem:[%s2 + $0x10] sm:$0xff]
  %v210 = vld [vmem:[%s2 + $0x18] sm:$0xff]
  %vm211 = vcmask 261120
  %v213 = vsel %vm211, %v145, 0
  %v216 = vsel %vm211, %v148, 0
  %v219 = vsel %vm211, %v153, 0
  %v222 = vsel %vm211, %v156, 0
  %v225 = vsel %vm211, %v161, 0
  %v228 = vsel %vm211, %v164, 0
  %v231 = vsel %vm211, %v169, 0
  %v234 = vsel %vm211, %v172, 0
  %v237 = vsel %vm211, %v177, 0
  %v240 = vsel %vm211, %v180, 0
  %v243 = vsel %vm211, %v185, 0
  %v246 = vsel %vm211, %v188, 0
  %v249 = vsel %vm211, %v193, 0
  %v252 = vsel %vm211, %v196, 0
  %v255 = vsel %vm211, %v201, 0
  %v258 = vsel %vm211, %v204, 0
  %260 = vmatprep.subr.mxu0 0.0
  %261 = vmatpush1.msra.mxu0 %v207
  %262 = vmatprep.subr.mxu0 0.0
  %263 = vmatpush1.msra.mxu0 %v208
  %264 = vmatprep.subr.mxu0 0.0
  %265 = vmatpush1.msra.mxu0 %v209
  %266 = vmatprep.subr.mxu0 0.0
  %267 = vmatpush1.msra.mxu0 %v210
  %268 = vmatprep.subr.mxu0 0.0
  %269 = vmatpush1.msra.mxu0 0.0
  %270 = vmatprep.subr.mxu0 0.0
  %271 = vmatpush1.msra.mxu0 0.0
  %272 = vmatprep.subr.mxu0 0.0
  %273 = vmatpush1.msra.mxu0 0.0
  %274 = vmatprep.subr.mxu0 0.0
  %275 = vmatpush1.msra.mxu0 0.0
  %276 = vmatprep.subr.mxu0 0.0
  %277 = vmatpush1.msra.mxu0 0.0
  %278 = vmatprep.subr.mxu0 0.0
  %279 = vmatpush1.msra.mxu0 0.0
  %280 = vmatprep.subr.mxu0 0.0
  %281 = vmatpush1.msra.mxu0 0.0
  %282 = vmatprep.subr.mxu0 0.0
  %283 = vmatpush1.msra.mxu0 0.0
  %284 = vmatprep.subr.mxu0 0.0
  %285 = vmatpush1.msra.mxu0 0.0
  %286 = vmatprep.subr.mxu0 0.0
  %287 = vmatpush1.msra.mxu0 0.0
  %288 = vmatprep.subr.mxu0 0.0
  %289 = vmatpush1.msra.mxu0 0.0
  %290 = vmatprep.subr.mxu0 0.0
  %291 = vmatpush1.msra.mxu0 0.0
  %292 = vmatprep.subr.mxu0 0.0
  %293 = vmatpush1.msra.mxu0 0.0
  %294 = vmatprep.subr.mxu0 0.0
  %295 = vmatpush1.msra.mxu0 0.0
  %296 = vmatprep.subr.mxu0 0.0
  %297 = vmatpush1.msra.mxu0 0.0
  %298 = vmatprep.subr.mxu0 0.0
  %299 = vmatpush1.msra.mxu0 0.0
  %300 = vmatprep.subr.mxu0 0.0
  %301 = vmatpush1.msra.mxu0 0.0
  %302 = vmatprep.subr.mxu0 0.0
  %303 = vmatpush1.msra.mxu0 0.0
  %304 = vmatprep.subr.mxu0 0.0
  %305 = vmatpush1.msra.mxu0 0.0
  %306 = vmatprep.subr.mxu0 0.0
  %307 = vmatpush1.msra.mxu0 0.0
  %308 = vmatprep.subr.mxu0 0.0
  %309 = vmatpush1.msra.mxu0 0.0
  %310 = vmatprep.subr.mxu0 0.0
  %311 = vmatpush1.msra.mxu0 0.0
  %312 = vmatprep.subr.mxu0 0.0
  %313 = vmatpush1.msra.mxu0 0.0
  %314 = vmatprep.subr.mxu0 0.0
  %315 = vmatpush1.msra.mxu0 0.0
  %316 = vmatprep.subr.mxu0 0.0
  %317 = vmatpush1.msra.mxu0 0.0
  %318 = vmatprep.subr.mxu0 0.0
  %319 = vmatpush1.msra.mxu0 0.0
  %320 = vmatprep.subr.mxu0 0.0
  %321 = vmatpush1.msra.mxu0 0.0
  %322 = vmatprep.subr.mxu0 0.0
  %323 = vmatpush1.msra.mxu0 0.0
  %324 = vmatprep.mubr.f32.mxu0 0.0
  %325 = vmatmul.mubr.f32.gmra.mrb[0].mxu0 %v213
  %v326 = vpop.f32.mrb[0].mxu0
  %v327 = vadd.f32 0.0, %v326
  %v328 = vpop.f32.mrb[0].mxu0
  %329 = vmatprep.mubr.f32.mxu0 0.0
  %330 = vmatmul.mubr.f32.gmra.mrb[0].mxu0 %v216
  %v331 = vpop.f32.mrb[0].mxu0
  %v332 = vadd.f32 0.0, %v331
  %v333 = vpop.f32.mrb[0].mxu0
  %334 = vmatprep.mubr.f32.mxu0 0.0
  %335 = vmatmul.mubr.f32.gmra.mrb[0].mxu0 %v219
  %v336 = vpop.f32.mrb[0].mxu0
  %v337 = vadd.f32 0.0, %v336
  %v338 = vpop.f32.mrb[0].mxu0
  %339 = vmatprep.mubr.f32.mxu0 0.0
  %340 = vmatmul.mubr.f32.gmra.mrb[0].mxu0 %v222
  %v341 = vpop.f32.mrb[0].mxu0
  %v342 = vadd.f32 0.0, %v341
  %v343 = vpop.f32.mrb[0].mxu0
  %344 = vmatprep.mubr.f32.mxu0 0.0
  %345 = vmatmul.mubr.f32.gmra.mrb[0].mxu0 %v225
  %v346 = vpop.f32.mrb[0].mxu0
  %v347 = vadd.f32 0.0, %v346
  %v348 = vpop.f32.mrb[0].mxu0
  %349 = vmatprep.mubr.f32.mxu0 0.0
  %350 = vmatmul.mubr.f32.gmra.mrb[0].mxu0 %v228
  %v351 = vpop.f32.mrb[0].mxu0
  %v352 = vadd.f32 0.0, %v351
  %v353 = vpop.f32.mrb[0].mxu0
  %354 = vmatprep.mubr.f32.mxu0 0.0
  %355 = vmatmul.mubr.f32.gmra.mrb[0].mxu0 %v231
  %v356 = vpop.f32.mrb[0].mxu0
  %v357 = vadd.f32 0.0, %v356
  %v358 = vpop.f32.mrb[0].mxu0
  %359 = vmatprep.mubr.f32.mxu0 0.0
  %360 = vmatmul.mubr.f32.gmra.mrb[0].mxu0 %v234
  %v361 = vpop.f32.mrb[0].mxu0
  %v362 = vadd.f32 0.0, %v361
  %v363 = vpop.f32.mrb[0].mxu0
  %364 = vmatprep.mubr.f32.mxu0 0.0
  %365 = vmatmul.mubr.f32.gmra.mrb[0].mxu0 %v237
  %v366 = vpop.f32.mrb[0].mxu0
  %v367 = vadd.f32 0.0, %v366
  %v368 = vpop.f32.mrb[0].mxu0
  %369 = vmatprep.mubr.f32.mxu0 0.0
  %370 = vmatmul.mubr.f32.gmra.mrb[0].mxu0 %v240
  %v371 = vpop.f32.mrb[0].mxu0
  %v372 = vadd.f32 0.0, %v371
  %v373 = vpop.f32.mrb[0].mxu0
  %374 = vmatprep.mubr.f32.mxu0 0.0
  %375 = vmatmul.mubr.f32.gmra.mrb[0].mxu0 %v243
  %v376 = vpop.f32.mrb[0].mxu0
  %v377 = vadd.f32 0.0, %v376
  %v378 = vpop.f32.mrb[0].mxu0
  %379 = vmatprep.mubr.f32.mxu0 0.0
  %380 = vmatmul.mubr.f32.gmra.mrb[0].mxu0 %v246
  %v381 = vpop.f32.mrb[0].mxu0
  %v382 = vadd.f32 0.0, %v381
  %v383 = vpop.f32.mrb[0].mxu0
  %384 = vmatprep.mubr.f32.mxu0 0.0
  %385 = vmatmul.mubr.f32.gmra.mrb[0].mxu0 %v249
  %v386 = vpop.f32.mrb[0].mxu0
  %v387 = vadd.f32 0.0, %v386
  %v388 = vpop.f32.mrb[0].mxu0
  %389 = vmatprep.mubr.f32.mxu0 0.0
  %390 = vmatmul.mubr.f32.gmra.mrb[0].mxu0 %v252
  %v391 = vpop.f32.mrb[0].mxu0
  %v392 = vadd.f32 0.0, %v391
  %v393 = vpop.f32.mrb[0].mxu0
  %394 = vmatprep.mubr.f32.mxu0 0.0
  %395 = vmatmul.mubr.f32.gmra.mrb[0].mxu0 %v255
  %v396 = vpop.f32.mrb[0].mxu0
  %v397 = vadd.f32 0.0, %v396
  %v398 = vpop.f32.mrb[0].mxu0
  %399 = vmatprep.mubr.f32.mxu0 0.0
  %400 = vmatmul.mubr.f32.gmra.mrb[0].mxu0 %v258
  %v401 = vpop.f32.mrb[0].mxu0
  %v402 = vadd.f32 0.0, %v401
  %v403 = vpop.f32.mrb[0].mxu0
  %404 = vdwg.mxu0
  %vm405 = vcmask 31744
  %406 = vst.msk [vmem:[%s5] sm:$0xff] %vm405, %v327
  %407 = vst.msk [vmem:[%s5 + $0x8] sm:$0xff] %vm405, %v332
  %408 = vst.msk [vmem:[%s5 + $0x10] sm:$0xff] %vm405, %v337
  %409 = vst.msk [vmem:[%s5 + $0x18] sm:$0xff] %vm405, %v342
  %410 = vst.msk [vmem:[%s5 + $0x20] sm:$0xff] %vm405, %v347
  %411 = vst.msk [vmem:[%s5 + $0x28] sm:$0xff] %vm405, %v352
  %412 = vst.msk [vmem:[%s5 + $0x30] sm:$0xff] %vm405, %v357
  %413 = vst.msk [vmem:[%s5 + $0x38] sm:$0xff] %vm405, %v362
  %414 = vst.msk [vmem:[%s5 + $0x40] sm:$0xff] %vm405, %v367
  %415 = vst.msk [vmem:[%s5 + $0x48] sm:$0xff] %vm405, %v372
  %416 = vst.msk [vmem:[%s5 + $0x50] sm:$0xff] %vm405, %v377
  %417 = vst.msk [vmem:[%s5 + $0x58] sm:$0xff] %vm405, %v382
  %418 = vst.msk [vmem:[%s5 + $0x60] sm:$0xff] %vm405, %v387
  %419 = vst.msk [vmem:[%s5 + $0x68] sm:$0xff] %vm405, %v392
  %420 = vst.msk [vmem:[%s5 + $0x70] sm:$0xff] %vm405, %v397
  %421 = vst.msk [vmem:[%s5 + $0x78] sm:$0xff] %vm405, %v402
  %v422 = vld [vmem:[%s3] sm:$0xff]
  %v423 = vld [vmem:[%s3 + $0x8] sm:$0xff]
  %v424 = vld [vmem:[%s3 + $0x10] sm:$0xff]
  %v425 = vld [vmem:[%s3 + $0x18] sm:$0xff]
  %426 = vmatprep.subr.mxu0 0.0
  %427 = vmatpush1.msra.mxu0 %v422
  %428 = vmatprep.subr.mxu0 0.0
  %429 = vmatpush1.msra.mxu0 %v423
  %430 = vmatprep.subr.mxu0 0.0
  %431 = vmatpush1.msra.mxu0 %v424
  %432 = vmatprep.subr.mxu0 0.0
  %433 = vmatpush1.msra.mxu0 %v425
  %434 = vmatprep.subr.mxu0 0.0
  %435 = vmatpush1.msra.mxu0 0.0
  %436 = vmatprep.subr.mxu0 0.0
  %437 = vmatpush1.msra.mxu0 0.0
  %438 = vmatprep.subr.mxu0 0.0
  %439 = vmatpush1.msra.mxu0 0.0
  %440 = vmatprep.subr.mxu0 0.0
  %441 = vmatpush1.msra.mxu0 0.0
  %442 = vmatprep.subr.mxu0 0.0
  %443 = vmatpush1.msra.mxu0 0.0
  %444 = vmatprep.subr.mxu0 0.0
  %445 = vmatpush1.msra.mxu0 0.0
  %446 = vmatprep.subr.mxu0 0.0
  %447 = vmatpush1.msra.mxu0 0.0
  %448 = vmatprep.subr.mxu0 0.0
  %449 = vmatpush1.msra.mxu0 0.0
  %450 = vmatprep.subr.mxu0 0.0
  %451 = vmatpush1.msra.mxu0 0.0
  %452 = vmatprep.subr.mxu0 0.0
  %453 = vmatpush1.msra.mxu0 0.0
  %454 = vmatprep.subr.mxu0 0.0
  %455 = vmatpush1.msra.mxu0 0.0
  %456 = vmatprep.subr.mxu0 0.0
  %457 = vmatpush1.msra.mxu0 0.0
  %458 = vmatprep.subr.mxu0 0.0
  %459 = vmatpush1.msra.mxu0 0.0
  %460 = vmatprep.subr.mxu0 0.0
  %461 = vmatpush1.msra.mxu0 0.0
  %462 = vmatprep.subr.mxu0 0.0
  %463 = vmatpush1.msra.mxu0 0.0
  %464 = vmatprep.subr.mxu0 0.0
  %465 = vmatpush1.msra.mxu0 0.0
  %466 = vmatprep.subr.mxu0 0.0
  %467 = vmatpush1.msra.mxu0 0.0
  %468 = vmatprep.subr.mxu0 0.0
  %469 = vmatpush1.msra.mxu0 0.0
  %470 = vmatprep.subr.mxu0 0.0
  %471 = vmatpush1.msra.mxu0 0.0
  %472 = vmatprep.subr.mxu0 0.0
  %473 = vmatpush1.msra.mxu0 0.0
  %474 = vmatprep.subr.mxu0 0.0
  %475 = vmatpush1.msra.mxu0 0.0
  %476 = vmatprep.subr.mxu0 0.0
  %477 = vmatpush1.msra.mxu0 0.0
  %478 = vmatprep.subr.mxu0 0.0
  %479 = vmatpush1.msra.mxu0 0.0
  %480 = vmatprep.subr.mxu0 0.0
  %481 = vmatpush1.msra.mxu0 0.0
  %482 = vmatprep.subr.mxu0 0.0
  %483 = vmatpush1.msra.mxu0 0.0
  %484 = vmatprep.subr.mxu0 0.0
  %485 = vmatpush1.msra.mxu0 0.0
  %486 = vmatprep.subr.mxu0 0.0
  %487 = vmatpush1.msra.mxu0 0.0
  %488 = vmatprep.subr.mxu0 0.0
  %489 = vmatpush1.msra.mxu0 0.0
  %490 = vmatprep.mubr.f32.mxu0 0.0
  %491 = vmatmul.mubr.f32.gmra.mrb[0].mxu0 %v213
  %v492 = vpop.f32.mrb[0].mxu0
  %v493 = vadd.f32 0.0, %v492
  %v494 = vpop.f32.mrb[0].mxu0
  %495 = vmatprep.mubr.f32.mxu0 0.0
  %496 = vmatmul.mubr.f32.gmra.mrb[0].mxu0 %v216
  %v497 = vpop.f32.mrb[0].mxu0
  %v498 = vadd.f32 0.0, %v497
  %v499 = vpop.f32.mrb[0].mxu0
  %500 = vmatprep.mubr.f32.mxu0 0.0
  %501 = vmatmul.mubr.f32.gmra.mrb[0].mxu0 %v219
  %v502 = vpop.f32.mrb[0].mxu0
  %v503 = vadd.f32 0.0, %v502
  %v504 = vpop.f32.mrb[0].mxu0
  %505 = vmatprep.mubr.f32.mxu0 0.0
  %506 = vmatmul.mubr.f32.gmra.mrb[0].mxu0 %v222
  %v507 = vpop.f32.mrb[0].mxu0
  %v508 = vadd.f32 0.0, %v507
  %v509 = vpop.f32.mrb[0].mxu0
  %510 = vmatprep.mubr.f32.mxu0 0.0
  %511 = vmatmul.mubr.f32.gmra.mrb[0].mxu0 %v225
  %v512 = vpop.f32.mrb[0].mxu0
  %v513 = vadd.f32 0.0, %v512
  %v514 = vpop.f32.mrb[0].mxu0
  %515 = vmatprep.mubr.f32.mxu0 0.0
  %516 = vmatmul.mubr.f32.gmra.mrb[0].mxu0 %v228
  %v517 = vpop.f32.mrb[0].mxu0
  %v518 = vadd.f32 0.0, %v517
  %v519 = vpop.f32.mrb[0].mxu0
  %520 = vmatprep.mubr.f32.mxu0 0.0
  %521 = vmatmul.mubr.f32.gmra.mrb[0].mxu0 %v231
  %v522 = vpop.f32.mrb[0].mxu0
  %v523 = vadd.f32 0.0, %v522
  %v524 = vpop.f32.mrb[0].mxu0
  %525 = vmatprep.mubr.f32.mxu0 0.0
  %526 = vmatmul.mubr.f32.gmra.mrb[0].mxu0 %v234
  %v527 = vpop.f32.mrb[0].mxu0
  %v528 = vadd.f32 0.0, %v527
  %v529 = vpop.f32.mrb[0].mxu0
  %530 = vmatprep.mubr.f32.mxu0 0.0
  %531 = vmatmul.mubr.f32.gmra.mrb[0].mxu0 %v237
  %v532 = vpop.f32.mrb[0].mxu0
  %v533 = vadd.f32 0.0, %v532
  %v534 = vpop.f32.mrb[0].mxu0
  %535 = vmatprep.mubr.f32.mxu0 0.0
  %536 = vmatmul.mubr.f32.gmra.mrb[0].mxu0 %v240
  %v537 = vpop.f32.mrb[0].mxu0
  %v538 = vadd.f32 0.0, %v537
  %v539 = vpop.f32.mrb[0].mxu0
  %540 = vmatprep.mubr.f32.mxu0 0.0
  %541 = vmatmul.mubr.f32.gmra.mrb[0].mxu0 %v243
  %v542 = vpop.f32.mrb[0].mxu0
  %v543 = vadd.f32 0.0, %v542
  %v544 = vpop.f32.mrb[0].mxu0
  %545 = vmatprep.mubr.f32.mxu0 0.0
  %546 = vmatmul.mubr.f32.gmra.mrb[0].mxu0 %v246
  %v547 = vpop.f32.mrb[0].mxu0
  %v548 = vadd.f32 0.0, %v547
  %v549 = vpop.f32.mrb[0].mxu0
  %550 = vmatprep.mubr.f32.mxu0 0.0
  %551 = vmatmul.mubr.f32.gmra.mrb[0].mxu0 %v249
  %v552 = vpop.f32.mrb[0].mxu0
  %v553 = vadd.f32 0.0, %v552
  %v554 = vpop.f32.mrb[0].mxu0
  %555 = vmatprep.mubr.f32.mxu0 0.0
  %556 = vmatmul.mubr.f32.gmra.mrb[0].mxu0 %v252
  %v557 = vpop.f32.mrb[0].mxu0
  %v558 = vadd.f32 0.0, %v557
  %v559 = vpop.f32.mrb[0].mxu0
  %560 = vmatprep.mubr.f32.mxu0 0.0
  %561 = vmatmul.mubr.f32.gmra.mrb[0].mxu0 %v255
  %v562 = vpop.f32.mrb[0].mxu0
  %v563 = vadd.f32 0.0, %v562
  %v564 = vpop.f32.mrb[0].mxu0
  %565 = vmatprep.mubr.f32.mxu0 0.0
  %566 = vmatmul.mubr.f32.gmra.mrb[0].mxu0 %v258
  %v567 = vpop.f32.mrb[0].mxu0
  %v568 = vadd.f32 0.0, %v567
  %v569 = vpop.f32.mrb[0].mxu0
  %570 = vdwg.mxu0
  %571 = vst.msk [vmem:[%s6] sm:$0xff] %vm405, %v493
  %572 = vst.msk [vmem:[%s6 + $0x8] sm:$0xff] %vm405, %v498
  %573 = vst.msk [vmem:[%s6 + $0x10] sm:$0xff] %vm405, %v503
  %574 = vst.msk [vmem:[%s6 + $0x18] sm:$0xff] %vm405, %v508
  %575 = vst.msk [vmem:[%s6 + $0x20] sm:$0xff] %vm405, %v513
  %576 = vst.msk [vmem:[%s6 + $0x28] sm:$0xff] %vm405, %v518
  %577 = vst.msk [vmem:[%s6 + $0x30] sm:$0xff] %vm405, %v523
  %578 = vst.msk [vmem:[%s6 + $0x38] sm:$0xff] %vm405, %v528
  %579 = vst.msk [vmem:[%s6 + $0x40] sm:$0xff] %vm405, %v533
  %580 = vst.msk [vmem:[%s6 + $0x48] sm:$0xff] %vm405, %v538
  %581 = vst.msk [vmem:[%s6 + $0x50] sm:$0xff] %vm405, %v543
  %582 = vst.msk [vmem:[%s6 + $0x58] sm:$0xff] %vm405, %v548
  %583 = vst.msk [vmem:[%s6 + $0x60] sm:$0xff] %vm405, %v553
  %584 = vst.msk [vmem:[%s6 + $0x68] sm:$0xff] %vm405, %v558
  %585 = vst.msk [vmem:[%s6 + $0x70] sm:$0xff] %vm405, %v563
  %586 = vst.msk [vmem:[%s6 + $0x78] sm:$0xff] %vm405, %v568
  %v587 = vpack.c.bf16 %v148, %v145
  %v588 = vpack.c.bf16 %v156, %v153
  %v589 = vpack.c.bf16 %v164, %v161
  %v590 = vpack.c.bf16 %v172, %v169
  %v591 = vpack.c.bf16 %v180, %v177
  %v592 = vpack.c.bf16 %v188, %v185
  %v593 = vpack.c.bf16 %v196, %v193
  %v594 = vpack.c.bf16 %v204, %v201
  %v603 = vunpack.c.l.b16 %v587
  %v604 = vunpack.c.h.b16 %v587
  %v605 = vunpack.c.l.b16 %v588
  %v606 = vunpack.c.h.b16 %v588
  %v607 = vunpack.c.l.b16 %v589
  %v608 = vunpack.c.h.b16 %v589
  %v609 = vunpack.c.l.b16 %v590
  %v610 = vunpack.c.h.b16 %v590
  %v611 = vunpack.c.l.b16 %v591
  %v612 = vunpack.c.h.b16 %v591
  %v613 = vunpack.c.l.b16 %v592
  %v614 = vunpack.c.h.b16 %v592
  %v615 = vunpack.c.l.b16 %v593
  %v616 = vunpack.c.h.b16 %v593
  %v617 = vunpack.c.l.b16 %v594
  %v618 = vunpack.c.h.b16 %v594
  %v619 = vpack.c.b16 %v603, %v603
  %v620 = vpack.c.b16 %v604, %v604
  %v621 = vpack.c.b16 %v605, %v605
  %v622 = vpack.c.b16 %v606, %v606
  %v623 = vpack.c.b16 %v607, %v607
  %v624 = vpack.c.b16 %v608, %v608
  %v625 = vpack.c.b16 %v609, %v609
  %v626 = vpack.c.b16 %v610, %v610
  %v627 = vpack.c.b16 %v611, %v611
  %v628 = vpack.c.b16 %v612, %v612
  %v629 = vpack.c.b16 %v613, %v613
  %v630 = vpack.c.b16 %v614, %v614
  %v631 = vpack.c.b16 %v615, %v615
  %v632 = vpack.c.b16 %v616, %v616
  %v633 = vpack.c.b16 %v617, %v617
  %v634 = vpack.c.b16 %v618, %v618
  %vm651 = vcmask 257024
  %652 = vst.msk [vmem:[%s4] sm:$0xf] %vm651, %v619
  %653 = vst.msk [vmem:[%s4 + $0x4] sm:$0xf] %vm651, %v620
  %654 = vst.msk [vmem:[%s4 + $0x8] sm:$0xf] %vm651, %v621
  %655 = vst.msk [vmem:[%s4 + $0xc] sm:$0xf] %vm651, %v622
  %656 = vst.msk [vmem:[%s4 + $0x10] sm:$0xf] %vm651, %v623
  %657 = vst.msk [vmem:[%s4 + $0x14] sm:$0xf] %vm651, %v624
  %658 = vst.msk [vmem:[%s4 + $0x18] sm:$0xf] %vm651, %v625
  %659 = vst.msk [vmem:[%s4 + $0x1c] sm:$0xf] %vm651, %v626
  %660 = vst.msk [vmem:[%s4 + $0x20] sm:$0xf] %vm651, %v627
  %661 = vst.msk [vmem:[%s4 + $0x24] sm:$0xf] %vm651, %v628
  %662 = vst.msk [vmem:[%s4 + $0x28] sm:$0xf] %vm651, %v629
  %663 = vst.msk [vmem:[%s4 + $0x2c] sm:$0xf] %vm651, %v630
  %664 = vst.msk [vmem:[%s4 + $0x30] sm:$0xf] %vm651, %v631
  %665 = vst.msk [vmem:[%s4 + $0x34] sm:$0xf] %vm651, %v632
  %666 = vst.msk [vmem:[%s4 + $0x38] sm:$0xf] %vm651, %v633
  %667 = vst.msk [vmem:[%s4 + $0x3c] sm:$0xf] %vm651, %v634
  // Predicated region
  $region18: #{tpu_custom_call.1} parent=0 // pred_check
    _
  $region19: #{tpu_custom_call.1} parent=0 // pred_check_branch
    %669 = sbr.rel (0) target = $region21
  $region20: #{tpu_custom_call.1} parent=0 // pred_region
    _
  $region21: #{tpu_custom_call.1} parent=0 // pred_fallthru
    _
  // Predicated region
  $region22: #{tpu_custom_call.1} parent=0 // pred_check
    _
  $region23: #{tpu_custom_call.1} parent=0 // pred_check_branch
    %671 = sbr.rel (0) target = $region25
  $region24: #{tpu_custom_call.1} parent=0 // pred_region
    _
  $region25: #{tpu_custom_call.1} parent=0 // pred_fallthru
    _
  // Predicated region
  $region26: #{tpu_custom_call.1} parent=0 // pred_check
    _
  $region27: #{tpu_custom_call.1} parent=0 // pred_check_branch
    %673 = sbr.rel (0) target = $region29
  $region28: #{tpu_custom_call.1} parent=0 // pred_region
    _
  $region29: #{tpu_custom_call.1} parent=0 // pred_fallthru
    _
  // Predicated region
  $region30: #{tpu_custom_call.1} parent=0 // pred_check
    _
  $region31: #{tpu_custom_call.1} parent=0 // pred_check_branch
    %675 = sbr.rel (0) target = $region33
  $region32: #{tpu_custom_call.1} parent=0 // pred_region
    _
  $region33: #{tpu_custom_call.1} parent=0 // pred_fallthru
    _
  // Predicated region
  $region34: #{tpu_custom_call.1} parent=0 // pred_check
    _
  $region35: #{tpu_custom_call.1} parent=0 // pred_check_branch
    %677 = sbr.rel (0) target = $region37
  $region36: #{tpu_custom_call.1} parent=0 // pred_region
    _
  $region37: #{tpu_custom_call.1} parent=0 // pred_fallthru
    _
  // Predicated region
  $region38: #{tpu_custom_call.1} parent=0 // pred_check
    _
  $region39: #{tpu_custom_call.1} parent=0 // pred_check_branch
    %679 = sbr.rel (0) target = $region41
  $region40: #{tpu_custom_call.1} parent=0 // pred_region
    _
  $region41: #{tpu_custom_call.1} parent=0 // pred_fallthru
    _

</llo_original>
